<compile_context>
chip_gen: v6e
topology: v6e:2x2x1
jax: 0.10.0
libtpu: 0.0.40
codegen_flags: <defaults>
</compile_context>

<pallas_src>
import functools
import math

import jax
import jax.numpy as jnp
from jax.experimental import pallas as pl
from jax.experimental.pallas import tpu as pltpu


def _pe2d_add_kernel(x_ref, pe_ref, o_ref):
    # x_ref/o_ref: (1, tc, tl); pe_ref: (tc, tl) -- batch-invariant, broadcasts
    # over the leading batch dim.  Native-dtype add (f32 here; bf16 stays
    # packed [16,128] per vreg on v6e/v7x).
    o_ref[...] = x_ref[...] + pe_ref[...]


@functools.lru_cache(maxsize=None)
def _make_pe(C, H, W, dtype_name):
    """pe_y + pe_x exactly as the PyTorch forward; shape (C, H*W), cached."""
    dtype = jnp.dtype(dtype_name)
    k = jnp.arange(C)
    k2 = (k - (k % 2)).astype(jnp.float32)                      # 2 * (c // 2)
    freq = jnp.exp(k2 * (-(math.log(10000.0) / C)))             # (C,)
    even = (k % 2 == 0)[:, None, None]                          # (C, 1, 1)

    y = jnp.arange(H, dtype=jnp.float32)
    xw = jnp.arange(W, dtype=jnp.float32)
    ang_y = y[None, :, None] * freq[:, None, None]              # (C, H, 1)
    ang_x = xw[None, None, :] * freq[:, None, None]             # (C, 1, W)

    pe_y = jnp.where(even, jnp.sin(ang_y), jnp.cos(ang_y))      # (C, H, 1)
    pe_x = jnp.where(even, jnp.sin(ang_x), jnp.cos(ang_x))      # (C, 1, W)
    pe = (pe_y + pe_x).reshape(C, H * W)
    # PyTorch writes the f32 sin/cos into zeros_like(tensor) -> input dtype.
    return pe.astype(dtype)


def _lane_fold(C, HW):
    """Smallest divisor g of C such that g*HW is a multiple of 128 (lane-dense)."""
    if HW % 128 == 0:
        return 1
    for g in range(1, C + 1):
        if C % g == 0 and (g * HW) % 128 == 0:
            return g
    return 1  # fall back: full-HW last dim, stores are masked but correct


def positional_encoding_2d(x, *, target_block_bytes=4 << 20,
                           vmem_limit_bytes=48 << 20):
    """x: (B, C, H, W) -> x + pe_y + pe_x, same shape/dtype as the PyTorch module."""
    B, C, H, W = x.shape
    HW = H * W
    itemsize = jnp.dtype(x.dtype).itemsize

    pe = _make_pe(C, H, W, jnp.dtype(x.dtype).name)     # (C, HW), cached

    # Fold channels so the last (lane) dim is a multiple of 128.
    g = _lane_fold(C, HW)
    Cg, L = C // g, g * HW
    x3 = x.reshape(B, Cg, L)
    pe2 = pe.reshape(Cg, L)

    # dtype-aware sublane minimum: 8 (f32) / 16 (bf16, f16) / 32 (int8, fp8).
    s = max(8, 32 // itemsize)

    row_bytes = L * itemsize
    if row_bytes >= target_block_bytes:
        # Huge feature maps: keep a minimal fully-packed channel slab and tile
        # the lane axis instead of letting tc drop below the sublane minimum.
        tc = Cg if Cg <= s else s
        tl = max(128, (target_block_bytes // (tc * itemsize)) // 128 * 128)
        tl = min(tl, L)
    else:
        tl = L
        tc = target_block_bytes // row_bytes
        if tc >= Cg:
            tc = Cg
        else:
            tc = min(max(s, (tc // s) * s), Cg)
    nc = pl.cdiv(Cg, tc)
    nl = pl.cdiv(L, tl)

    # v7x has 2 TensorCores: with B == 1 make sure there are >= 2 parallel grid
    # steps so both cores stream, even if the whole array fits one block.
    if B == 1 and nc * nl == 1 and Cg >= 2 * s:
        tc = max(s, ((Cg // 2 + s - 1) // s) * s)
        nc = pl.cdiv(Cg, tc)

    out3 = pl.pallas_call(
        _pe2d_add_kernel,
        out_shape=jax.ShapeDtypeStruct((B, Cg, L), x.dtype),
        grid_spec=pltpu.PrefetchScalarGridSpec(
            num_scalar_prefetch=0,
            # batch innermost -> pe block index constant across it, stays
            # VMEM-resident; all axes independent -> "parallel".
            grid=(nc, nl, B),
            in_specs=[
                pl.BlockSpec((1, tc, tl), lambda jc, jl, b: (b, jc, jl)),   # x
                pl.BlockSpec((tc, tl), lambda jc, jl, b: (jc, jl)),         # pe
            ],
            out_specs=pl.BlockSpec((1, tc, tl), lambda jc, jl, b: (b, jc, jl)),
        ),
        compiler_params=pltpu.CompilerParams(
            dimension_semantics=("parallel", "parallel", "parallel"),
            vmem_limit_bytes=vmem_limit_bytes),
        # Pointwise same-shape add: let the output reuse x's buffer when donated.
        input_output_aliases={0: 0},
    )(x3, pe2)
    return out3.reshape(B, C, H, W)


def _reference(x):
    # Pure-JAX reference mirroring the PyTorch forward.
    B, C, H, W = x.shape
    y_pos = jnp.arange(H, dtype=jnp.float32)[:, None]                 # (H, 1)
    x_pos = jnp.arange(W, dtype=jnp.float32)[None, :]                 # (1, W)
    div_term = jnp.exp(jnp.arange(0, C, 2, dtype=jnp.float32)
                       * -(math.log(10000.0) / C))                    # (C//2,)
    ang_y = y_pos[None, None] * div_term[:, None, None]               # (1, C//2, H, W)
    ang_x = x_pos[None, None] * div_term[:, None, None]
    ang_y = jnp.broadcast_to(ang_y, (B, C // 2, H, W))
    ang_x = jnp.broadcast_to(ang_x, (B, C // 2, H, W))
    pe_y = jnp.zeros_like(x)
    pe_x = jnp.zeros_like(x)
    pe_y = pe_y.at[:, 0::2].set(jnp.sin(ang_y)).at[:, 1::2].set(jnp.cos(ang_y))
    pe_x = pe_x.at[:, 0::2].set(jnp.sin(ang_x)).at[:, 1::2].set(jnp.cos(ang_x))
    return x + pe_y + pe_x


if __name__ == "__main__":
    key = jax.random.PRNGKey(0)

    # Test 1: module's nominal small shape.
    B, C, H, W = 2, 4, 16, 16
    x = jax.random.normal(key, (B, C, H, W), dtype=jnp.float32)
    ref = _reference(x)
    out = jax.block_until_ready(positional_encoding_2d(x))
    assert out.shape == x.shape and out.dtype == x.dtype
    assert jnp.allclose(out, ref, atol=1e-5, rtol=1e-5), "mismatch vs reference"

    # Test 2: force multiple channel chunks (partial edge block + resident pe
    # across batch) by shrinking the block-byte target.
    key2 = jax.random.PRNGKey(1)
    x2 = jax.random.normal(key2, (1, 40, 16, 16), dtype=jnp.float32)
    ref2 = _reference(x2)
    out2 = jax.block_until_ready(
        positional_encoding_2d(x2, target_block_bytes=32 * 1024))
    assert jnp.allclose(out2, ref2, atol=1e-5, rtol=1e-5), "mismatch (chunked)"

    print("KERNEL_OK")
</pallas_src>

<mosaic_0001>
module attributes {stable_mosaic.version = 11 : i64} {
  func.func @_pe2d_add_kernel(%arg0: i32, %arg1: i32, %arg2: i32, %arg3: memref<1x4x256xf32, #tpu.memory_space<vmem>>, %arg4: memref<4x256xf32, #tpu.memory_space<vmem>>, %arg5: memref<1x4x256xf32, #tpu.memory_space<vmem>>) attributes {dimension_semantics = [#tpu.dimension_semantics<parallel>, #tpu.dimension_semantics<parallel>, #tpu.dimension_semantics<parallel>], iteration_bounds = array<i64: 1, 1, 2>, scalar_prefetch = 0 : i64, scratch_operands = 0 : i64, tpu.core_type = #tpu.core_type<tc>, window_params = [{transform_indices = @transform_0, window_bounds = array<i64: 1, 4, 256>}, {transform_indices = @transform_1, window_bounds = array<i64: 4, 256>}, {transform_indices = @transform_2, window_bounds = array<i64: 1, 4, 256>}]} {
    %c0 = arith.constant 0 : index
    %c0_0 = arith.constant 0 : index
    %c0_1 = arith.constant 0 : index
    %0 = vector.load %arg3[%c0, %c0_0, %c0_1] : memref<1x4x256xf32, #tpu.memory_space<vmem>>, vector<1x4x256xf32>
    %c0_2 = arith.constant 0 : index
    %c0_3 = arith.constant 0 : index
    %1 = vector.load %arg4[%c0_2, %c0_3] : memref<4x256xf32, #tpu.memory_space<vmem>>, vector<4x256xf32>
    %2 = vector.shape_cast %1 : vector<4x256xf32> to vector<1x4x256xf32>
    %3 = arith.addf %0, %2 : vector<1x4x256xf32>
    %c0_4 = arith.constant 0 : index
    %c0_5 = arith.constant 0 : index
    %c0_6 = arith.constant 0 : index
    %4 = vector.load %arg5[%c0_4, %c0_5, %c0_6] : memref<1x4x256xf32, #tpu.memory_space<vmem>>, vector<1x4x256xf32>
    tpu.vector_store %arg5[%c0_4, %c0_5, %c0_6], %3 {strides = array<i32>} : memref<1x4x256xf32, #tpu.memory_space<vmem>>, vector<1x4x256xf32>,
    return
  }
  func.func @transform_0(%arg0: i32, %arg1: i32, %arg2: i32) -> (i32, i32, i32) {
    %c0_i32 = arith.constant 0 : i32
    return %arg2, %arg0, %arg1 : i32, i32, i32
  }
  func.func @transform_1(%arg0: i32, %arg1: i32, %arg2: i32) -> (i32, i32) {
    %c0_i32 = arith.constant 0 : i32
    return %arg0, %arg1 : i32, i32
  }
  func.func @transform_2(%arg0: i32, %arg1: i32, %arg2: i32) -> (i32, i32, i32) {
    %c0_i32 = arith.constant 0 : i32
    return %arg2, %arg0, %arg1 : i32, i32, i32
  }
}

</mosaic_0001>

<llo_original>
// kernel: tpu_custom_call.1
$region0: #{tpu_custom_call.1}
  #allocation0 [shape = 'u32[]', space=smem, size = 0x4, offset = 0x4, fixed_abs, tag = 'smem constant byte address 0x4 - core index']
  #allocation1 [shape = 'u32[144,128]{1,0:T(1,128)}', space=vmem, size = 0x12000, scoped, tag = 'internal scratch']
  %s0 = inlined_call_operand.hbm [shape: f32[2,4,256], index: 0, kind: input, shape index: {}, may-alias: {0,2}]
  %s1 = inlined_call_operand.vmem [shape: f32[4,256], index: 1, kind: input, shape index: {}]
  %s2 = inlined_call_operand.hbm [shape: f32[2,4,256], index: 2, kind: output, shape index: {}, may-alias: {0,2}]
  %s3 = sld [smem:[#allocation0]]
  $region45: #{tpu_custom_call.1} parent=0
    _
  %s5 = ssub.s32 1, %s3
  %s6 = scalar_select 0, %s5, %s3
  $region1: #{tpu_custom_call.1} parent=0
    #allocation2 [shape = 'u8[8192]{0}', space=vmem, size = 0x2000, scoped, tag = 'input window, operand 0']
    #allocation3 [shape = 's32[2]{0}', space=sflag, size = 0x8, scoped, tag = 'scoped memory for tpu_custom_call.1']
    #allocation4 [shape = 's32[2]{0}', space=sflag, size = 0x8, scoped, tag = 'scoped memory for tpu_custom_call.1']
    #allocation5 [shape = 'u8[8192]{0}', space=vmem, size = 0x2000, scoped, tag = 'output window, operand 0']
    %7 = vsyncpa [#allocation3], 0
    %s8 = scalar_lea.sflag [#allocation3], 1
    %9 = vsyncpa %s8, 0
    %10 = vsyncpa [#allocation4], 0
    %s11 = scalar_lea.sflag [#allocation4], 1
    %12 = vsyncpa %s11, 0
    loop: start=0, step=1, limit=4
    $region2: #{tpu_custom_call.1} parent=1 // loop_pre_header
      _
    $region3: #{tpu_custom_call.1} parent=1 // loop_header
      %s14 = sphi 0, %s18
      %p15 = scmp.ge.s32.totalorder %s14, 4
      %s21 = sphi 0, %s40
      %s22 = sphi 0, %s36
      %s23 = sphi 0, %s32
      %s24 = sphi 0, %s21
      %s25 = sphi 0, %s22
      %s26 = sphi 0, %s23
      %s27 = sphi 0, %s24
      %s28 = sphi 0, %s25
      %s29 = sphi 0, %s26
      %s47 = sphi 0, %s49
      %s50 = sphi 0, %s47
      %s51 = sphi 0, %s50
      %s67 = sphi 0, %s51
      %s75 = sphi 0, %s77
      %s78 = sphi 0, %s75
      %s79 = sphi 0, %s78
      %s95 = sphi 0, %s79
      %s105 = sphi 0, %s107
      %s108 = sphi 0, %s105
      %s109 = sphi 0, %s108
      %s125 = sphi 0, %s109
    $region4: #{tpu_custom_call.1} parent=1 // loop_header_branch
      %17 = sbr.rel (%p15) target = $region8
    $region5: #{tpu_custom_call.1} parent=1 // loop_body
      %s19 = ssub.s32 %s14, 1
      %s20 = ssub.s32 %s14, 2
      %s30 = sadd.s32 1, %s23
      %p31 = scmp.ge.s32.totalorder %s30, 2
      %s32 = scalar_select %p31, 0, %s30
      %s33 = sadd.s32 1, %s22
      %s34 = scalar_select %p31, %s33, %s22
      %p35 = scmp.ge.s32.totalorder %s34, 1
      %s36 = scalar_select %p35, 0, %s34
      %s37 = sadd.s32 1, %s21
      %s38 = scalar_select %p35, %s37, %s21
      %p39 = scmp.ge.s32.totalorder %s38, 1
      %s40 = scalar_select %p39, 0, %s38
      %s41 = ssub.s32 %s23, %s32
      %s42 = ssub.s32 %s21, %s40
      %s43 = sor.u32 %s41, %s42
      %s44 = ssub.s32 %s22, %s36
      %s45 = sor.u32 %s43, %s44
      %p46 = scmp.eq.s32.totalorder %s45, 0
      %s48 = sadd.s32 %s47, 1
      %s49 = scalar_select %p46, %s47, %s48
      %p52 = pneg %p46
      %p53 = scmp.eq.s32.totalorder %s14, 1
      %p54 = por %p52, %p53
      %p55 = scmp.ne.s32.totalorder %s47, %s50
      %p56 = scmp.eq.s32.totalorder %s14, 0
      %p57 = por %p55, %p56
      %p58 = scmp.ne.s32.totalorder %s47, %s50
      %p59 = scmp.eq.s32.totalorder %s19, 1
      %p60 = por %p58, %p59
      %p61 = scmp.ne.s32.totalorder %s50, %s51
      %p62 = scmp.eq.s32.totalorder %s19, 0
      %p63 = por %p61, %p62
      %p64 = scmp.ne.s32.totalorder %s50, %s51
      %p65 = scmp.eq.s32.totalorder %s20, 1
      %p66 = por %p64, %p65
      %p68 = scmp.ne.s32.totalorder %s51, %s67
      %p69 = scmp.eq.s32.totalorder %s20, 0
      %p70 = por %p68, %p69
      %s71 = ssub.s32 %s21, %s40
      %s72 = ssub.s32 %s22, %s36
      %s73 = sor.u32 %s71, %s72
      %p74 = scmp.eq.s32.totalorder %s73, 0
      %s76 = sadd.s32 %s75, 1
      %s77 = scalar_select %p74, %s75, %s76
      %p80 = pneg %p74
      %p81 = scmp.eq.s32.totalorder %s14, 1
      %p82 = por %p80, %p81
      %p83 = scmp.ne.s32.totalorder %s75, %s78
      %p84 = scmp.eq.s32.totalorder %s14, 0
      %p85 = por %p83, %p84
      %p86 = scmp.ne.s32.totalorder %s75, %s78
      %p87 = scmp.eq.s32.totalorder %s19, 1
      %p88 = por %p86, %p87
      %p89 = scmp.ne.s32.totalorder %s78, %s79
      %p90 = scmp.eq.s32.totalorder %s19, 0
      %p91 = por %p89, %p90
      %p92 = scmp.ne.s32.totalorder %s78, %s79
      %p93 = scmp.eq.s32.totalorder %s20, 1
      %p94 = por %p92, %p93
      %p96 = scmp.ne.s32.totalorder %s79, %s95
      %p97 = scmp.eq.s32.totalorder %s20, 0
      %p98 = por %p96, %p97
      %s99 = ssub.s32 %s23, %s32
      %s100 = ssub.s32 %s21, %s40
      %s101 = sor.u32 %s99, %s100
      %s102 = ssub.s32 %s22, %s36
      %s103 = sor.u32 %s101, %s102
      %p104 = scmp.eq.s32.totalorder %s103, 0
      %s106 = sadd.s32 %s105, 1
      %s107 = scalar_select %p104, %s105, %s106
      %p110 = pneg %p104
      %p111 = scmp.eq.s32.totalorder %s14, 1
      %p112 = por %p110, %p111
      %p113 = scmp.ne.s32.totalorder %s105, %s108
      %p114 = scmp.eq.s32.totalorder %s14, 0
      %p115 = por %p113, %p114
      %p116 = scmp.ne.s32.totalorder %s105, %s108
      %p117 = scmp.eq.s32.totalorder %s19, 1
      %p118 = por %p116, %p117
      %p119 = scmp.ne.s32.totalorder %s108, %s109
      %p120 = scmp.eq.s32.totalorder %s19, 0
      %p121 = por %p119, %p120
      %p122 = scmp.ne.s32.totalorder %s108, %s109
      %p123 = scmp.eq.s32.totalorder %s20, 1
      %p124 = por %p122, %p123
      %p126 = scmp.ne.s32.totalorder %s109, %s125
      %p127 = scmp.eq.s32.totalorder %s20, 0
      %p128 = por %p126, %p127
      %p129 = scmp.le.s32.totalorder 1, %s14
      %p130 = scmp.lt.s32.totalorder %s14, 3
      %p131 = pnand %p129, %p130
      %p132 = pneg %p131
      // Predicated region
      $region9: #{tpu_custom_call.1} parent=5 // pred_check
        _
      $region10: #{tpu_custom_call.1} parent=5 // pred_check_branch
        %134 = sbr.rel (%p131) target = $region12
      $region11: #{tpu_custom_call.1} parent=5 // pred_region
        %s135 = ssub.s32 %s14, 1
        // Predicated region
        $region13: #{tpu_custom_call.1} parent=11 // pred_check
          %p136 = pneg %p91
        $region14: #{tpu_custom_call.1} parent=11 // pred_check_branch
          %138 = sbr.rel (%p136) target = $region16
        $region15: #{tpu_custom_call.1} parent=11 // pred_region
          %s139 = smul.u32 2, %s25
          %p140 = scmp.lt.s32.totalorder %s24, 0
          %s141 = scalar_select %p140, %s24, 0
          %p142 = scmp.lt.s32.totalorder %s139, 1
          %s143 = scalar_select %p142, %s139, 1
          %s144 = smul.addr %s141, 2
          %s145 = sadd.s32 %s143, %s144
          %s146 = smul.addr %s145, 4
          %s147 = scalar_lea.vmem %s1, %s146
          %s148 = smul.u32 2, %s25
        $region16: #{tpu_custom_call.1} parent=11 // pred_fallthru
          _
      $region12: #{tpu_custom_call.1} parent=5 // pred_fallthru
        _
      %p149 = scmp.lt.s32.totalorder %s14, 2
      // Predicated region
      $region17: #{tpu_custom_call.1} parent=5 // pred_check
        %p150 = pneg %p149
      $region18: #{tpu_custom_call.1} parent=5 // pred_check_branch
        %152 = sbr.rel (%p150) target = $region20
      $region19: #{tpu_custom_call.1} parent=5 // pred_region
        // Predicated region
        $region21: #{tpu_custom_call.1} parent=19 // pred_check
          %p153 = pneg %p57
        $region22: #{tpu_custom_call.1} parent=19 // pred_check_branch
          %155 = sbr.rel (%p153) target = $region24
        $region23: #{tpu_custom_call.1} parent=19 // pred_region
          %s156 = sand.u32 %s47, 1
          %s157 = scalar_lea.sflag [#allocation3], %s156
          %s158 = sand.u32 %s47, 1
          %s159 = smul.addr %s158, 8
          %s160 = scalar_lea.vmem [#allocation2], %s159
          %s161 = smul.u32 2, %s22
          %s163 = ssub.s32 128, 128
          %164 = vsyncadd %s157, %s163
          %s165 = smul.addr %s21, 2
          %s166 = sadd.s32 %s161, %s165
          %s167 = smul.addr %s23, 2
          %s168 = sadd.s32 %s166, %s167
          %s169 = smul.addr %s168, 64
          %s170 = scalar_lea.hbm %s0, %s169
          %s172 = sshll.u32 %s160, 4
          %s173 = int_to_ptr.vmem [resolvable:$true] %s172
          %175 = dma.hbm_to_vmem [thread:$0]  %s170, 128, %s173, %s157
        $region24: #{tpu_custom_call.1} parent=19 // pred_fallthru
          _
      $region20: #{tpu_custom_call.1} parent=5 // pred_fallthru
        _
      %p176 = scmp.le.s32.totalorder 1, %s14
      %p177 = scmp.lt.s32.totalorder %s14, 3
      %p178 = pnand %p176, %p177
      %p179 = pneg %p178
      // Predicated region
      $region25: #{tpu_custom_call.1} parent=5 // pred_check
        _
      $region26: #{tpu_custom_call.1} parent=5 // pred_check_branch
        %181 = sbr.rel (%p178) target = $region28
      $region27: #{tpu_custom_call.1} parent=5 // pred_region
        %s182 = ssub.s32 %s14, 1
        %s183 = sand.u32 %s50, 1
        %s184 = scalar_lea.sflag [#allocation3], %s183
        %s185 = sand.u32 %s50, 1
        %s186 = smul.addr %s185, 8
        %s187 = scalar_lea.vmem [#allocation2], %s186
        // Predicated region
        $region29: #{tpu_custom_call.1} parent=27 // pred_check
          %p188 = pneg %p63
        $region30: #{tpu_custom_call.1} parent=27 // pred_check_branch
          %190 = sbr.rel (%p188) target = $region32
        $region31: #{tpu_custom_call.1} parent=27 // pred_region
          %191 = dma.done %s184, 128
        $region32: #{tpu_custom_call.1} parent=27 // pred_fallthru
          _
        %s192 = sand.u32 %s50, 1
        %s193 = scalar_lea.sflag [#allocation3], %s192
        %s194 = sand.u32 %s50, 1
        %s195 = smul.addr %s194, 8
        %s196 = scalar_lea.vmem [#allocation2], %s195
        %p197 = pneg %p63
        %p198 = pneg %p60
        %s199 = smul.u32 2, %s25
        %p200 = scmp.lt.s32.totalorder %s24, 0
        %s201 = scalar_select %p200, %s24, 0
        %p202 = scmp.lt.s32.totalorder %s199, 1
        %s203 = scalar_select %p202, %s199, 1
        %s204 = smul.addr %s201, 2
        %s205 = sadd.s32 %s203, %s204
        %s206 = smul.addr %s205, 4
        %s207 = scalar_lea.vmem %s1, %s206
        %p208 = pneg %p91
        %p209 = pneg %p88
        %p210 = pneg %p121
        %p211 = pneg %p118
        %s212 = sand.u32 %s108, 1
        %s213 = scalar_lea.sflag [#allocation4], %s212
        %s214 = sand.u32 %s108, 1
        %s215 = smul.addr %s214, 8
        %s216 = scalar_lea.vmem [#allocation5], %s215
        %s217 = smul.u32 2, %s25
        %s218 = smul.u32 2, %s25
        %p219 = scmp.lt.s32.totalorder %s24, 0
        %s220 = scalar_select %p219, %s24, 0
        %p221 = scmp.lt.s32.totalorder %s218, 1
        %s222 = scalar_select %p221, %s218, 1
        %s223 = smul.addr %s220, 2
        %s224 = sadd.s32 %s222, %s223
        %s225 = smul.addr %s224, 4
        %s226 = scalar_lea.vmem %s1, %s225
        %s227 = smul.u32 2, %s25
        %s228 = smul.u32 2, %s25
        %v229 = vld [vmem:[%s187] sm:$0xff]
        %v230 = vld [vmem:[%s226] sm:$0xff]
        %v231 = vadd.f32 %v229, %v230
        %232 = vst [vmem:[%s216] sm:$0xff] %v231
        %s233 = sand.u32 %s108, 1
        %s234 = scalar_lea.sflag [#allocation4], %s233
        %s235 = sand.u32 %s108, 1
        %s236 = smul.addr %s235, 8
        %s237 = scalar_lea.vmem [#allocation5], %s236
        // Predicated region
        $region33: #{tpu_custom_call.1} parent=27 // pred_check
          %p238 = pneg %p118
        $region34: #{tpu_custom_call.1} parent=27 // pred_check_branch
          %240 = sbr.rel (%p238) target = $region36
        $region35: #{tpu_custom_call.1} parent=27 // pred_region
          %s241 = smul.u32 2, %s25
          %s243 = ssub.s32 128, 128
          %244 = vsyncadd %s234, %s243
          %s245 = smul.addr %s24, 2
          %s246 = sadd.s32 %s241, %s245
          %s247 = smul.addr %s26, 2
          %s248 = sadd.s32 %s246, %s247
          %s249 = smul.addr %s248, 64
          %s250 = scalar_lea.hbm %s2, %s249
          %s252 = sshll.u32 %s237, 4
          %s253 = int_to_ptr.vmem [resolvable:$true] %s252
          %255 = dma.vmem_to_hbm [thread:$0]  %s253, 128, %s250, %s234
        $region36: #{tpu_custom_call.1} parent=27 // pred_fallthru
          _
      $region28: #{tpu_custom_call.1} parent=5 // pred_fallthru
        _
      %p256 = scmp.le.s32.totalorder 2, %s14
      // Predicated region
      $region37: #{tpu_custom_call.1} parent=5 // pred_check
        %p257 = pneg %p256
      $region38: #{tpu_custom_call.1} parent=5 // pred_check_branch
        %259 = sbr.rel (%p257) target = $region40
      $region39: #{tpu_custom_call.1} parent=5 // pred_region
        %s260 = ssub.s32 %s14, 2
        // Predicated region
        $region41: #{tpu_custom_call.1} parent=39 // pred_check
          %p261 = pneg %p124
        $region42: #{tpu_custom_call.1} parent=39 // pred_check_branch
          %263 = sbr.rel (%p261) target = $region44
        $region43: #{tpu_custom_call.1} parent=39 // pred_region
          %s264 = sand.u32 %s109, 1
          %s265 = scalar_lea.sflag [#allocation4], %s264
          %s266 = sand.u32 %s109, 1
          %s267 = smul.addr %s266, 8
          %s268 = scalar_lea.vmem [#allocation5], %s267
          %269 = dma.done %s265, 128
        $region44: #{tpu_custom_call.1} parent=39 // pred_fallthru
          _
      $region40: #{tpu_custom_call.1} parent=5 // pred_fallthru
        _
    $region6: #{tpu_custom_call.1} parent=1 // loop_footer
      %s18 = sadd.s32 1, %s14
    $region7: #{tpu_custom_call.1} parent=1 // loop_footer_branch
      %13 = sbr.rel target = $region3
    $region8: #{tpu_custom_call.1} parent=1 // loop_exit
      _
    %270 = vsyncpa [#allocation3], 1
    %s271 = scalar_lea.sflag [#allocation3], 1
    %272 = vsyncpa %s271, 1
    %273 = vsyncpa [#allocation4], 1
    %s274 = scalar_lea.sflag [#allocation4], 1
    %275 = vsyncpa %s274, 1

</llo_original>
